<compile_context>
chip_gen: v7x
topology: tpu7x:2x2x1
jax: 0.10.0
libtpu: 0.0.40
codegen_flags: <defaults>
</compile_context>

<pallas_src>
import functools
import math

import jax
import jax.numpy as jnp
from jax import lax
from jax.experimental import pallas as pl
from jax.experimental.pallas import tpu as pltpu


def _flow_nll_kernel(x1_ref, x2_ref, wst_ref, bst_ref, out_ref, acc_ref,
                     *, n_rows, half_dim, block_rows, needs_mask):
    i = pl.program_id(0)

    @pl.when(i == 0)
    def _init():
        acc_ref[...] = jnp.zeros_like(acc_ref)

    # Compute in f32 regardless of input dtype (bf16 inputs halve HBM bytes on
    # v6e/v7x; v5e has no bf16 VPU/EUP, so elementwise math stays in f32).
    x1 = x1_ref[...].astype(jnp.float32)          # (Bt, h)  identity half
    x2 = x2_ref[...].astype(jnp.float32)          # (Bt, h)  transformed half

    # One fused MXU push for both conditioner nets: [s | t] = x1 @ [Ws|Wt] + [bs|bt]
    st = (jnp.dot(x1, wst_ref[...].astype(jnp.float32),
                  preferred_element_type=jnp.float32)
          + bst_ref[...].astype(jnp.float32))     # (Bt, 2h)
    s = jnp.tanh(st[:, :half_dim])
    t = st[:, half_dim:]

    # Affine coupling on the second half: z = [x1, x2 * exp(s) + t]
    z2 = x2 * jnp.exp(s) + t                      # (Bt, h)

    if needs_mask:
        # Zero the padded rows' contribution (padded x1 rows are already zero).
        row = i * block_rows + lax.broadcasted_iota(jnp.int32, (z2.shape[0], 1), 0)
        z2 = jnp.where(row < n_rows, z2, 0.0)

    # Log-prior reduction without materializing concat([x1, z2]):
    #   sum(z*z) = sum(x1*x1) + sum(z2*z2); constant and 1/B folded in at finalize.
    acc_ref[...] += (jnp.sum(x1 * x1, keepdims=True)
                     + jnp.sum(z2 * z2, keepdims=True))

    @pl.when(i == pl.num_programs(0) - 1)
    def _finalize():
        d = 2 * half_dim
        # nll = -mean(log_pz) = 0.5 * sum(z^2)/B + 0.5 * D * log(2*pi)
        out_ref[...] = (acc_ref[...] * jnp.float32(0.5 / n_rows)
                        + jnp.float32(0.5 * d * math.log(2.0 * math.pi)))


def model_forward(x, ws, bs, wt, bt, *, block_rows=128):
    """Returns scalar -mean(log_prior(flow(x)))."""
    B, D = x.shape
    h = D // 2

    # ---- host-side layout plumbing (free in XLA) --------------------------
    x1 = x[:, :h]                               # identity half, lane-0 aligned
    x2 = x[:, h:]                               # transformed half
    wst = jnp.concatenate([ws, wt], axis=1)     # fused conditioner weight (h, 2h)
    bst = jnp.concatenate([bs, bt], axis=1)     # fused conditioner bias   (1, 2h)

    # ---- batch tiling ------------------------------------------------------
    tile_rows = min(block_rows, B)
    n_blocks = -(-B // tile_rows)
    b_pad = n_blocks * tile_rows
    if b_pad != B:
        x1 = jnp.pad(x1, ((0, b_pad - B), (0, 0)))
        x2 = jnp.pad(x2, ((0, b_pad - B), (0, 0)))

    kernel = functools.partial(
        _flow_nll_kernel,
        n_rows=B, half_dim=h, block_rows=tile_rows, needs_mask=(b_pad != B),
    )

    out = pl.pallas_call(
        kernel,
        out_shape=jax.ShapeDtypeStruct((1, 1), jnp.float32),
        grid_spec=pltpu.PrefetchScalarGridSpec(
            num_scalar_prefetch=0,
            grid=(n_blocks,),
            in_specs=[
                pl.BlockSpec((tile_rows, h), lambda i: (i, 0)),   # x1 tile (pipelined)
                pl.BlockSpec((tile_rows, h), lambda i: (i, 0)),   # x2 tile (pipelined)
                pl.BlockSpec((h, 2 * h), lambda i: (0, 0)),       # fused W (resident)
                pl.BlockSpec((1, 2 * h), lambda i: (0, 0)),       # fused b (resident)
            ],
            out_specs=pl.BlockSpec((1, 1), lambda i: (0, 0)),     # scalar result
            scratch_shapes=[pltpu.VMEM((1, 1), jnp.float32)],     # running sum(z^2)
        ),
        compiler_params=pltpu.CompilerParams(
            dimension_semantics=("arbitrary",),   # sequential reduction over batch
        ),
    )(x1, x2, wst, bst)
    return out[0, 0]


def _reference_forward(x, ws, bs, wt, bt):
    """Pure-JAX reference for correctness checking."""
    x = x.astype(jnp.float32)
    D = x.shape[-1]
    h = D // 2
    x1, x2 = x[:, :h], x[:, h:]
    s = jnp.tanh(x1 @ ws + bs)
    t = x1 @ wt + bt
    z = jnp.concatenate([x1, x2 * jnp.exp(s) + t], axis=-1)
    log_pz = -0.5 * jnp.sum(z * z, axis=-1) - 0.5 * D * math.log(2.0 * math.pi)
    return -jnp.mean(log_pz)


if __name__ == "__main__":
    D = 32
    h = D // 2

    key = jax.random.PRNGKey(0)
    kx, kws, kbs, kwt, kbt, kx2 = jax.random.split(key, 6)

    ws = 0.1 * jax.random.normal(kws, (h, h), dtype=jnp.float32)
    bs = 0.1 * jax.random.normal(kbs, (1, h), dtype=jnp.float32)
    wt = 0.1 * jax.random.normal(kwt, (h, h), dtype=jnp.float32)
    bt = 0.1 * jax.random.normal(kbt, (1, h), dtype=jnp.float32)

    fwd = jax.jit(functools.partial(model_forward, block_rows=128))

    # Case 1: batch divides the tile evenly (4 grid steps).
    B = 512
    x = jax.random.normal(kx, (B, D), dtype=jnp.float32)
    nll = fwd(x, ws, bs, wt, bt)
    jax.block_until_ready(nll)
    ref = _reference_forward(x, ws, bs, wt, bt)
    assert jnp.allclose(nll, ref, rtol=1e-5, atol=1e-5), (nll, ref)

    # Case 2: ragged batch (exercises host padding + in-kernel row mask).
    B2 = 200
    xr = jax.random.normal(kx2, (B2, D), dtype=jnp.float32)
    nll2 = fwd(xr, ws, bs, wt, bt)
    jax.block_until_ready(nll2)
    ref2 = _reference_forward(xr, ws, bs, wt, bt)
    assert jnp.allclose(nll2, ref2, rtol=1e-5, atol=1e-5), (nll2, ref2)

    print("KERNEL_OK")
</pallas_src>

<mosaic_0001>
module attributes {stable_mosaic.version = 11 : i64} {
  func.func @_flow_nll_kernel(%arg0: i32, %arg1: memref<128x16xf32, #tpu.memory_space<vmem>>, %arg2: memref<128x16xf32, #tpu.memory_space<vmem>>, %arg3: memref<16x32xf32, #tpu.memory_space<vmem>>, %arg4: memref<1x32xf32, #tpu.memory_space<vmem>>, %arg5: memref<1x1xf32, #tpu.memory_space<vmem>>, %arg6: memref<1x1xf32, #tpu.memory_space<vmem>>) attributes {dimension_semantics = [#tpu.dimension_semantics<arbitrary>], iteration_bounds = array<i64: 4>, scalar_prefetch = 0 : i64, scratch_operands = 1 : i64, tpu.core_type = #tpu.core_type<tc>, window_params = [{transform_indices = @transform_0, window_bounds = array<i64: 128, 16>}, {transform_indices = @transform_1, window_bounds = array<i64: 128, 16>}, {pipeline_mode = #tpu.pipeline_mode<synchronous>, transform_indices = @transform_2, window_bounds = array<i64: 16, 32>}, {pipeline_mode = #tpu.pipeline_mode<synchronous>, transform_indices = @transform_3, window_bounds = array<i64: 1, 32>}, {pipeline_mode = #tpu.pipeline_mode<synchronous>, transform_indices = @transform_4, window_bounds = array<i64: 1, 1>}]} {
    %c0_i32 = arith.constant 0 : i32
    %0 = arith.cmpi eq, %arg0, %c0_i32 : i32
    %1 = arith.extui %0 : i1 to i32
    %c0_i32_0 = arith.constant 0 : i32
    %2 = arith.cmpi ne, %1, %c0_i32_0 : i32
    scf.if %2 {
      %cst_15 = arith.constant 0.000000e+00 : f32
      %35 = vector.broadcast %cst_15 : f32 to vector<1x1xf32>
      %c0_16 = arith.constant 0 : index
      %c0_17 = arith.constant 0 : index
      %36 = vector.load %arg6[%c0_16, %c0_17] : memref<1x1xf32, #tpu.memory_space<vmem>>, vector<1x1xf32>
      tpu.vector_store %arg6[%c0_16, %c0_17], %35 {strides = array<i32>} : memref<1x1xf32, #tpu.memory_space<vmem>>, vector<1x1xf32>,
    } else {
    }
    %c0 = arith.constant 0 : index
    %c0_1 = arith.constant 0 : index
    %3 = vector.load %arg1[%c0, %c0_1] : memref<128x16xf32, #tpu.memory_space<vmem>>, vector<128x16xf32>
    %c0_2 = arith.constant 0 : index
    %c0_3 = arith.constant 0 : index
    %4 = vector.load %arg2[%c0_2, %c0_3] : memref<128x16xf32, #tpu.memory_space<vmem>>, vector<128x16xf32>
    %c0_4 = arith.constant 0 : index
    %c0_5 = arith.constant 0 : index
    %5 = vector.load %arg3[%c0_4, %c0_5] : memref<16x32xf32, #tpu.memory_space<vmem>>, vector<16x32xf32>
    %cst = arith.constant dense<0.000000e+00> : vector<128x32xf32>
    %6 = tpu.matmul %3, %5, %cst {dimension_numbers = #tpu.dot_dimension_numbers<[1], [0], [0], [1], [0, 0, 1, 1], [], []>} : vector<128x16xf32>, vector<16x32xf32>, vector<128x32xf32> -> vector<128x32xf32>
    %c0_6 = arith.constant 0 : index
    %c0_7 = arith.constant 0 : index
    %7 = vector.load %arg4[%c0_6, %c0_7] : memref<1x32xf32, #tpu.memory_space<vmem>>, vector<1x32xf32>
    %8 = vector.broadcast %7 : vector<1x32xf32> to vector<128x32xf32>
    %9 = arith.addf %6, %8 : vector<128x32xf32>
    %10 = vector.extract_strided_slice %9 {offsets = [0, 0], sizes = [128, 16], strides = [1, 1]} : vector<128x32xf32> to vector<128x16xf32>
    %11 = math.tanh %10 : vector<128x16xf32>
    %12 = vector.extract_strided_slice %9 {offsets = [0, 16], sizes = [128, 16], strides = [1, 1]} : vector<128x32xf32> to vector<128x16xf32>
    %13 = math.exp %11 : vector<128x16xf32>
    %14 = arith.mulf %4, %13 : vector<128x16xf32>
    %15 = arith.addf %14, %12 : vector<128x16xf32>
    %c0_8 = arith.constant 0 : index
    %c0_9 = arith.constant 0 : index
    %16 = vector.load %arg6[%c0_8, %c0_9] : memref<1x1xf32, #tpu.memory_space<vmem>>, vector<1x1xf32>
    %17 = arith.mulf %3, %3 : vector<128x16xf32>
    %18 = vector.shape_cast %17 : vector<128x16xf32> to vector<1x128x16xf32>
    %cst_10 = arith.constant dense<0.000000e+00> : vector<1xf32>
    %19 = vector.multi_reduction <add>, %18, %cst_10 [1, 2] : vector<1x128x16xf32> to vector<1xf32>
    %20 = vector.shape_cast %19 : vector<1xf32> to vector<1x1x1xf32>
    %21 = vector.extract %20[0, 0, 0] : f32 from vector<1x1x1xf32>
    %22 = vector.broadcast %21 : f32 to vector<1x1xf32>
    %23 = arith.mulf %15, %15 : vector<128x16xf32>
    %24 = vector.shape_cast %23 : vector<128x16xf32> to vector<1x128x16xf32>
    %cst_11 = arith.constant dense<0.000000e+00> : vector<1xf32>
    %25 = vector.multi_reduction <add>, %24, %cst_11 [1, 2] : vector<1x128x16xf32> to vector<1xf32>
    %26 = vector.shape_cast %25 : vector<1xf32> to vector<1x1x1xf32>
    %27 = vector.extract %26[0, 0, 0] : f32 from vector<1x1x1xf32>
    %28 = vector.broadcast %27 : f32 to vector<1x1xf32>
    %29 = arith.addf %22, %28 : vector<1x1xf32>
    %30 = arith.addf %16, %29 : vector<1x1xf32>
    %c0_12 = arith.constant 0 : index
    %c0_13 = arith.constant 0 : index
    %31 = vector.load %arg6[%c0_12, %c0_13] : memref<1x1xf32, #tpu.memory_space<vmem>>, vector<1x1xf32>
    tpu.vector_store %arg6[%c0_12, %c0_13], %30 {strides = array<i32>} : memref<1x1xf32, #tpu.memory_space<vmem>>, vector<1x1xf32>,
    %c3_i32 = arith.constant 3 : i32
    %32 = arith.cmpi eq, %arg0, %c3_i32 : i32
    %33 = arith.extui %32 : i1 to i32
    %c0_i32_14 = arith.constant 0 : i32
    %34 = arith.cmpi ne, %33, %c0_i32_14 : i32
    scf.if %34 {
      %c0_15 = arith.constant 0 : index
      %c0_16 = arith.constant 0 : index
      %35 = vector.load %arg6[%c0_15, %c0_16] : memref<1x1xf32, #tpu.memory_space<vmem>>, vector<1x1xf32>
      %cst_17 = arith.constant 9.765625E-4 : f32
      %36 = vector.broadcast %cst_17 : f32 to vector<1x1xf32>
      %37 = arith.mulf %35, %36 : vector<1x1xf32>
      %cst_18 = arith.constant 29.4060326 : f32
      %38 = vector.broadcast %cst_18 : f32 to vector<1x1xf32>
      %39 = arith.addf %37, %38 : vector<1x1xf32>
      %c0_19 = arith.constant 0 : index
      %c0_20 = arith.constant 0 : index
      %40 = vector.load %arg5[%c0_19, %c0_20] : memref<1x1xf32, #tpu.memory_space<vmem>>, vector<1x1xf32>
      tpu.vector_store %arg5[%c0_19, %c0_20], %39 {strides = array<i32>} : memref<1x1xf32, #tpu.memory_space<vmem>>, vector<1x1xf32>,
    } else {
    }
    return
  }
  func.func @transform_0(%arg0: i32) -> (i32, i32) {
    %c0_i32 = arith.constant 0 : i32
    %c0_i32_0 = arith.constant 0 : i32
    return %arg0, %c0_i32 : i32, i32
  }
  func.func @transform_1(%arg0: i32) -> (i32, i32) {
    %c0_i32 = arith.constant 0 : i32
    %c0_i32_0 = arith.constant 0 : i32
    return %arg0, %c0_i32 : i32, i32
  }
  func.func @transform_2(%arg0: i32) -> (i32, i32) {
    %c0_i32 = arith.constant 0 : i32
    %c0_i32_0 = arith.constant 0 : i32
    %c0_i32_1 = arith.constant 0 : i32
    return %c0_i32, %c0_i32_0 : i32, i32
  }
  func.func @transform_3(%arg0: i32) -> (i32, i32) {
    %c0_i32 = arith.constant 0 : i32
    %c0_i32_0 = arith.constant 0 : i32
    %c0_i32_1 = arith.constant 0 : i32
    return %c0_i32, %c0_i32_0 : i32, i32
  }
  func.func @transform_4(%arg0: i32) -> (i32, i32) {
    %c0_i32 = arith.constant 0 : i32
    %c0_i32_0 = arith.constant 0 : i32
    %c0_i32_1 = arith.constant 0 : i32
    return %c0_i32, %c0_i32_0 : i32, i32
  }
}

</mosaic_0001>

<llo_original>
// kernel: model_forward.1
$region0: #{model_forward.1}
  #allocation0 [shape = 'u32[]', space=smem, size = 0x4, offset = 0x4, fixed_abs, tag = 'smem constant byte address 0x4 - core index']
  #allocation1 [shape = 'u32[144,128]{1,0:T(1,128)}', space=vmem, size = 0x12000, scoped, tag = 'internal scratch']
  #allocation2 [shape = 'f32[1,1]{1,0:T(1,128)}', space=vmem, size = 0x200, scoped, tag = 'scratch operand']
  %s0 = inlined_call_operand.vmem [shape: f32[512,16], index: 0, kind: input, shape index: {}]
  %s1 = inlined_call_operand.vmem [shape: f32[512,16], index: 1, kind: input, shape index: {}]
  %s2 = inlined_call_operand.vmem [shape: f32[16,32], index: 2, kind: input, shape index: {}]
  %s3 = inlined_call_operand.vmem [shape: f32[1,32], index: 3, kind: input, shape index: {}]
  %s4 = inlined_call_operand.hbm [shape: f32[1,1], index: 4, kind: output, shape index: {}]
  %s5 = sld [smem:[#allocation0]]
  $region57: #{model_forward.1} parent=0
    _
  %s7 = ssub.s32 1, %s5
  %s8 = scalar_select 0, %s7, %s5
  $region1: #{model_forward.1} parent=0
    #allocation3 [shape = 'u8[512]{0}', space=vmem, size = 0x400, scoped, tag = 'output window, operand 0, single buffered']
    #allocation4 [shape = 's32[2]{0}', space=sflag, size = 0x8, scoped, tag = 'scoped memory for model_forward.1']
    %9 = vsyncpa [#allocation4], 0
    loop: start=0, step=1, limit=6
    $region2: #{model_forward.1} parent=1 // loop_pre_header
      _
    $region3: #{model_forward.1} parent=1 // loop_header
      %s11 = sphi 0, %s15
      %p12 = scmp.ge.s32.totalorder %s11, 6
      %s21 = sphi 0, %s23
      %s24 = sphi 0, %s21
      %s25 = sphi 0, %s24
      %s41 = sphi 0, %s25
      %s47 = sphi 0, %s49
      %s50 = sphi 0, %s47
      %s51 = sphi 0, %s50
      %s67 = sphi 0, %s51
      %s71 = sphi 0, %s71
      %s73 = sphi 0, %s71
      %s74 = sphi 0, %s73
      %s88 = sphi 0, %s74
      %s92 = sphi 0, %s92
      %s94 = sphi 0, %s92
      %s95 = sphi 0, %s94
      %s109 = sphi 0, %s95
      %s113 = sphi 0, %s113
      %s115 = sphi 0, %s113
      %s116 = sphi 0, %s115
      %s130 = sphi 0, %s116
    $region4: #{model_forward.1} parent=1 // loop_header_branch
      %14 = sbr.rel (%p12) target = $region8
    $region5: #{model_forward.1} parent=1 // loop_body
      %s16 = ssub.s32 %s11, 1
      %s17 = ssub.s32 %s11, 2
      %s18 = sadd.s32 %s11, 1
      %s19 = ssub.s32 %s11, %s18
      %p20 = scmp.eq.s32.totalorder %s19, 0
      %s22 = sadd.s32 %s21, 1
      %s23 = scalar_select %p20, %s21, %s22
      %p26 = pneg %p20
      %p27 = scmp.eq.s32.totalorder %s11, 3
      %p28 = por %p26, %p27
      %p29 = scmp.ne.s32.totalorder %s21, %s24
      %p30 = scmp.eq.s32.totalorder %s11, 0
      %p31 = por %p29, %p30
      %p32 = scmp.ne.s32.totalorder %s21, %s24
      %p33 = scmp.eq.s32.totalorder %s16, 3
      %p34 = por %p32, %p33
      %p35 = scmp.ne.s32.totalorder %s24, %s25
      %p36 = scmp.eq.s32.totalorder %s16, 0
      %p37 = por %p35, %p36
      %p38 = scmp.ne.s32.totalorder %s24, %s25
      %p39 = scmp.eq.s32.totalorder %s17, 3
      %p40 = por %p38, %p39
      %p42 = scmp.ne.s32.totalorder %s25, %s41
      %p43 = scmp.eq.s32.totalorder %s17, 0
      %p44 = por %p42, %p43
      %s45 = ssub.s32 %s11, %s18
      %p46 = scmp.eq.s32.totalorder %s45, 0
      %s48 = sadd.s32 %s47, 1
      %s49 = scalar_select %p46, %s47, %s48
      %p52 = pneg %p46
      %p53 = scmp.eq.s32.totalorder %s11, 3
      %p54 = por %p52, %p53
      %p55 = scmp.ne.s32.totalorder %s47, %s50
      %p56 = scmp.eq.s32.totalorder %s11, 0
      %p57 = por %p55, %p56
      %p58 = scmp.ne.s32.totalorder %s47, %s50
      %p59 = scmp.eq.s32.totalorder %s16, 3
      %p60 = por %p58, %p59
      %p61 = scmp.ne.s32.totalorder %s50, %s51
      %p62 = scmp.eq.s32.totalorder %s16, 0
      %p63 = por %p61, %p62
      %p64 = scmp.ne.s32.totalorder %s50, %s51
      %p65 = scmp.eq.s32.totalorder %s17, 3
      %p66 = por %p64, %p65
      %p68 = scmp.ne.s32.totalorder %s51, %s67
      %p69 = scmp.eq.s32.totalorder %s17, 0
      %p70 = por %p68, %p69
      %s72 = sadd.s32 %s71, 1
      %p75 = scmp.eq.s32.totalorder %s11, 3
      %p76 = scmp.ne.s32.totalorder %s71, %s73
      %p77 = scmp.eq.s32.totalorder %s11, 0
      %p78 = por %p76, %p77
      %p79 = scmp.ne.s32.totalorder %s71, %s73
      %p80 = scmp.eq.s32.totalorder %s16, 3
      %p81 = por %p79, %p80
      %p82 = scmp.ne.s32.totalorder %s73, %s74
      %p83 = scmp.eq.s32.totalorder %s16, 0
      %p84 = por %p82, %p83
      %p85 = scmp.ne.s32.totalorder %s73, %s74
      %p86 = scmp.eq.s32.totalorder %s17, 3
      %p87 = por %p85, %p86
      %p89 = scmp.ne.s32.totalorder %s74, %s88
      %p90 = scmp.eq.s32.totalorder %s17, 0
      %p91 = por %p89, %p90
      %s93 = sadd.s32 %s92, 1
      %p96 = scmp.eq.s32.totalorder %s11, 3
      %p97 = scmp.ne.s32.totalorder %s92, %s94
      %p98 = scmp.eq.s32.totalorder %s11, 0
      %p99 = por %p97, %p98
      %p100 = scmp.ne.s32.totalorder %s92, %s94
      %p101 = scmp.eq.s32.totalorder %s16, 3
      %p102 = por %p100, %p101
      %p103 = scmp.ne.s32.totalorder %s94, %s95
      %p104 = scmp.eq.s32.totalorder %s16, 0
      %p105 = por %p103, %p104
      %p106 = scmp.ne.s32.totalorder %s94, %s95
      %p107 = scmp.eq.s32.totalorder %s17, 3
      %p108 = por %p106, %p107
      %p110 = scmp.ne.s32.totalorder %s95, %s109
      %p111 = scmp.eq.s32.totalorder %s17, 0
      %p112 = por %p110, %p111
      %s114 = sadd.s32 %s113, 1
      %p117 = scmp.eq.s32.totalorder %s11, 3
      %p118 = scmp.ne.s32.totalorder %s113, %s115
      %p119 = scmp.eq.s32.totalorder %s11, 0
      %p120 = por %p118, %p119
      %p121 = scmp.ne.s32.totalorder %s113, %s115
      %p122 = scmp.eq.s32.totalorder %s16, 3
      %p123 = por %p121, %p122
      %p124 = scmp.ne.s32.totalorder %s115, %s116
      %p125 = scmp.eq.s32.totalorder %s16, 0
      %p126 = por %p124, %p125
      %p127 = scmp.ne.s32.totalorder %s115, %s116
      %p128 = scmp.eq.s32.totalorder %s17, 3
      %p129 = por %p127, %p128
      %p131 = scmp.ne.s32.totalorder %s116, %s130
      %p132 = scmp.eq.s32.totalorder %s17, 0
      %p133 = por %p131, %p132
      %p134 = scmp.le.s32.totalorder 1, %s11
      %p135 = scmp.lt.s32.totalorder %s11, 5
      %p136 = pnand %p134, %p135
      %p137 = pneg %p136
      // Predicated region
      $region9: #{model_forward.1} parent=5 // pred_check
        _
      $region10: #{model_forward.1} parent=5 // pred_check_branch
        %139 = sbr.rel (%p136) target = $region12
      $region11: #{model_forward.1} parent=5 // pred_region
        %s140 = ssub.s32 %s11, 1
        // Predicated region
        $region13: #{model_forward.1} parent=11 // pred_check
          %p141 = pneg %p84
        $region14: #{model_forward.1} parent=11 // pred_check_branch
          %143 = sbr.rel (%p141) target = $region16
        $region15: #{model_forward.1} parent=11 // pred_region
          _
        $region16: #{model_forward.1} parent=11 // pred_fallthru
          _
        // Predicated region
        $region17: #{model_forward.1} parent=11 // pred_check
          %p144 = pneg %p105
        $region18: #{model_forward.1} parent=11 // pred_check_branch
          %146 = sbr.rel (%p144) target = $region20
        $region19: #{model_forward.1} parent=11 // pred_region
          _
        $region20: #{model_forward.1} parent=11 // pred_fallthru
          _
      $region12: #{model_forward.1} parent=5 // pred_fallthru
        _
      %p147 = scmp.lt.s32.totalorder %s11, 4
      // Predicated region
      $region21: #{model_forward.1} parent=5 // pred_check
        %p148 = pneg %p147
      $region22: #{model_forward.1} parent=5 // pred_check_branch
        %150 = sbr.rel (%p148) target = $region24
      $region23: #{model_forward.1} parent=5 // pred_region
        // Predicated region
        $region25: #{model_forward.1} parent=23 // pred_check
          %p151 = pneg %p31
        $region26: #{model_forward.1} parent=23 // pred_check_branch
          %153 = sbr.rel (%p151) target = $region28
        $region27: #{model_forward.1} parent=23 // pred_region
          %s154 = smul.u32 16, %s11
          %p155 = scmp.lt.s32.totalorder %s154, 63
          %s156 = scalar_select %p155, %s154, 63
          %s157 = smul.addr %s156, 8
          %s158 = scalar_lea.vmem %s0, %s157
          %s159 = smul.u32 16, %s11
        $region28: #{model_forward.1} parent=23 // pred_fallthru
          _
        // Predicated region
        $region29: #{model_forward.1} parent=23 // pred_check
          %p160 = pneg %p57
        $region30: #{model_forward.1} parent=23 // pred_check_branch
          %162 = sbr.rel (%p160) target = $region32
        $region31: #{model_forward.1} parent=23 // pred_region
          %s163 = smul.u32 16, %s11
          %p164 = scmp.lt.s32.totalorder %s163, 63
          %s165 = scalar_select %p164, %s163, 63
          %s166 = smul.addr %s165, 8
          %s167 = scalar_lea.vmem %s1, %s166
          %s168 = smul.u32 16, %s11
        $region32: #{model_forward.1} parent=23 // pred_fallthru
          _
      $region24: #{model_forward.1} parent=5 // pred_fallthru
        _
      %p169 = scmp.le.s32.totalorder 1, %s11
      %p170 = scmp.lt.s32.totalorder %s11, 5
      %p171 = pnand %p169, %p170
      %p172 = pneg %p171
      // Predicated region
      $region33: #{model_forward.1} parent=5 // pred_check
        _
      $region34: #{model_forward.1} parent=5 // pred_check_branch
        %174 = sbr.rel (%p171) target = $region36
      $region35: #{model_forward.1} parent=5 // pred_region
        %s175 = ssub.s32 %s11, 1
        %s176 = smul.u32 16, %s16
        %p177 = scmp.lt.s32.totalorder %s176, 63
        %s178 = scalar_select %p177, %s176, 63
        %s179 = smul.addr %s178, 8
        %s180 = scalar_lea.vmem %s0, %s179
        %p181 = pneg %p37
        %p182 = pneg %p34
        %s183 = smul.u32 16, %s16
        %p184 = scmp.lt.s32.totalorder %s183, 63
        %s185 = scalar_select %p184, %s183, 63
        %s186 = smul.addr %s185, 8
        %s187 = scalar_lea.vmem %s1, %s186
        %p188 = pneg %p63
        %p189 = pneg %p60
        %p190 = pneg %p84
        %p191 = pneg %p81
        %p192 = pneg %p105
        %p193 = pneg %p102
        %p194 = pneg %p126
        %p195 = pneg %p123
        %s196 = smul.u32 16, %s16
        %p197 = scmp.lt.s32.totalorder %s196, 63
        %s198 = scalar_select %p197, %s196, 63
        %s199 = smul.addr %s198, 8
        %s200 = scalar_lea.vmem %s0, %s199
        %s201 = smul.u32 16, %s16
        %s202 = smul.u32 16, %s16
        %p203 = scmp.lt.s32.totalorder %s202, 63
        %s204 = scalar_select %p203, %s202, 63
        %s205 = smul.addr %s204, 8
        %s206 = scalar_lea.vmem %s1, %s205
        %s207 = smul.u32 16, %s16
        %p208 = scmp.eq.s32.totalorder %s16, 0
        // Predicated region
        $region37: #{model_forward.1} parent=35 // pred_check
          %p209 = pneg %p208
        $region38: #{model_forward.1} parent=35 // pred_check_branch
          %211 = sbr.rel (%p209) target = $region40
        $region39: #{model_forward.1} parent=35 // pred_region
          %vm212 = vcmask 0
          %213 = vst.msk [vmem:[#allocation2] sm:$0x1] %vm212, 0.0
        $region40: #{model_forward.1} parent=35 // pred_fallthru
          _
        %v214 = vld [vmem:[%s200] sm:$0xff]
        %v215 = vld [vmem:[%s200 + $0x8] sm:$0xff]
        %v216 = vld [vmem:[%s200 + $0x10] sm:$0xff]
        %v217 = vld [vmem:[%s200 + $0x18] sm:$0xff]
        %v218 = vld [vmem:[%s200 + $0x20] sm:$0xff]
        %v219 = vld [vmem:[%s200 + $0x28] sm:$0xff]
        %v220 = vld [vmem:[%s200 + $0x30] sm:$0xff]
        %v221 = vld [vmem:[%s200 + $0x38] sm:$0xff]
        %v222 = vld [vmem:[%s200 + $0x40] sm:$0xff]
        %v223 = vld [vmem:[%s200 + $0x48] sm:$0xff]
        %v224 = vld [vmem:[%s200 + $0x50] sm:$0xff]
        %v225 = vld [vmem:[%s200 + $0x58] sm:$0xff]
        %v226 = vld [vmem:[%s200 + $0x60] sm:$0xff]
        %v227 = vld [vmem:[%s200 + $0x68] sm:$0xff]
        %v228 = vld [vmem:[%s200 + $0x70] sm:$0xff]
        %v229 = vld [vmem:[%s200 + $0x78] sm:$0xff]
        %v230 = vld [vmem:[%s206] sm:$0xff]
        %v231 = vld [vmem:[%s206 + $0x8] sm:$0xff]
        %v232 = vld [vmem:[%s206 + $0x10] sm:$0xff]
        %v233 = vld [vmem:[%s206 + $0x18] sm:$0xff]
        %v234 = vld [vmem:[%s206 + $0x20] sm:$0xff]
        %v235 = vld [vmem:[%s206 + $0x28] sm:$0xff]
        %v236 = vld [vmem:[%s206 + $0x30] sm:$0xff]
        %v237 = vld [vmem:[%s206 + $0x38] sm:$0xff]
        %v238 = vld [vmem:[%s206 + $0x40] sm:$0xff]
        %v239 = vld [vmem:[%s206 + $0x48] sm:$0xff]
        %v240 = vld [vmem:[%s206 + $0x50] sm:$0xff]
        %v241 = vld [vmem:[%s206 + $0x58] sm:$0xff]
        %v242 = vld [vmem:[%s206 + $0x60] sm:$0xff]
        %v243 = vld [vmem:[%s206 + $0x68] sm:$0xff]
        %v244 = vld [vmem:[%s206 + $0x70] sm:$0xff]
        %v245 = vld [vmem:[%s206 + $0x78] sm:$0xff]
        %v246 = vld [vmem:[%s2] sm:$0xff]
        %v247 = vld [vmem:[%s2 + $0x8] sm:$0xff]
        %v248 = vld [vmem:[%s3] sm:$0x1]
        %v250 = vlaneseq
        %v251 = vshrl.u32 %v250, 7
        %v252 = vsub.s32 0, %v251
        %v253 = vrot.slane %v248, %v252
        %vm255 = vcmask 130048
        %v257 = vsel %vm255, %v214, 0
        %v260 = vsel %vm255, %v215, 0
        %v263 = vsel %vm255, %v216, 0
        %v266 = vsel %vm255, %v217, 0
        %v269 = vsel %vm255, %v218, 0
        %v272 = vsel %vm255, %v219, 0
        %v275 = vsel %vm255, %v220, 0
        %v278 = vsel %vm255, %v221, 0
        %v281 = vsel %vm255, %v222, 0
        %v284 = vsel %vm255, %v223, 0
        %v287 = vsel %vm255, %v224, 0
        %v290 = vsel %vm255, %v225, 0
        %v293 = vsel %vm255, %v226, 0
        %v296 = vsel %vm255, %v227, 0
        %v299 = vsel %vm255, %v228, 0
        %v302 = vsel %vm255, %v229, 0
        %304 = vmatprep.subr.mxu0 0.0
        %305 = vmatpush1.msra.mxu0 %v246
        %306 = vmatprep.subr.mxu0 0.0
        %307 = vmatpush1.msra.mxu0 %v247
        %308 = vmatprep.subr.mxu0 0.0
        %309 = vmatpush1.msra.mxu0 0.0
        %310 = vmatprep.subr.mxu0 0.0
        %311 = vmatpush1.msra.mxu0 0.0
        %312 = vmatprep.subr.mxu0 0.0
        %313 = vmatpush1.msra.mxu0 0.0
        %314 = vmatprep.subr.mxu0 0.0
        %315 = vmatpush1.msra.mxu0 0.0
        %316 = vmatprep.subr.mxu0 0.0
        %317 = vmatpush1.msra.mxu0 0.0
        %318 = vmatprep.subr.mxu0 0.0
        %319 = vmatpush1.msra.mxu0 0.0
        %320 = vmatprep.subr.mxu0 0.0
        %321 = vmatpush1.msra.mxu0 0.0
        %322 = vmatprep.subr.mxu0 0.0
        %323 = vmatpush1.msra.mxu0 0.0
        %324 = vmatprep.subr.mxu0 0.0
        %325 = vmatpush1.msra.mxu0 0.0
        %326 = vmatprep.subr.mxu0 0.0
        %327 = vmatpush1.msra.mxu0 0.0
        %328 = vmatprep.subr.mxu0 0.0
        %329 = vmatpush1.msra.mxu0 0.0
        %330 = vmatprep.subr.mxu0 0.0
        %331 = vmatpush1.msra.mxu0 0.0
        %332 = vmatprep.subr.mxu0 0.0
        %333 = vmatpush1.msra.mxu0 0.0
        %334 = vmatprep.subr.mxu0 0.0
        %335 = vmatpush1.msra.mxu0 0.0
        %336 = vmatprep.subr.mxu0 0.0
        %337 = vmatpush1.msra.mxu0 0.0
        %338 = vmatprep.subr.mxu0 0.0
        %339 = vmatpush1.msra.mxu0 0.0
        %340 = vmatprep.subr.mxu0 0.0
        %341 = vmatpush1.msra.mxu0 0.0
        %342 = vmatprep.subr.mxu0 0.0
        %343 = vmatpush1.msra.mxu0 0.0
        %344 = vmatprep.subr.mxu0 0.0
        %345 = vmatpush1.msra.mxu0 0.0
        %346 = vmatprep.subr.mxu0 0.0
        %347 = vmatpush1.msra.mxu0 0.0
        %348 = vmatprep.subr.mxu0 0.0
        %349 = vmatpush1.msra.mxu0 0.0
        %350 = vmatprep.subr.mxu0 0.0
        %351 = vmatpush1.msra.mxu0 0.0
        %352 = vmatprep.subr.mxu0 0.0
        %353 = vmatpush1.msra.mxu0 0.0
        %354 = vmatprep.subr.mxu0 0.0
        %355 = vmatpush1.msra.mxu0 0.0
        %356 = vmatprep.subr.mxu0 0.0
        %357 = vmatpush1.msra.mxu0 0.0
        %358 = vmatprep.subr.mxu0 0.0
        %359 = vmatpush1.msra.mxu0 0.0
        %360 = vmatprep.subr.mxu0 0.0
        %361 = vmatpush1.msra.mxu0 0.0
        %362 = vmatprep.subr.mxu0 0.0
        %363 = vmatpush1.msra.mxu0 0.0
        %364 = vmatprep.subr.mxu0 0.0
        %365 = vmatpush1.msra.mxu0 0.0
        %366 = vmatprep.subr.mxu0 0.0
        %367 = vmatpush1.msra.mxu0 0.0
        %368 = vmatprep.mubr.f32.mxu0 0.0
        %369 = vmatmul.mubr.f32.gmra.mrb[0].mxu0 %v257
        %v370 = vpop.f32.mrb[0].mxu0
        %v371 = vadd.f32 %v253, %v370
        %v372 = vpop.f32.mrb[0].mxu0
        %373 = vmatprep.mubr.f32.mxu0 0.0
        %374 = vmatmul.mubr.f32.gmra.mrb[0].mxu0 %v260
        %v375 = vpop.f32.mrb[0].mxu0
        %v376 = vadd.f32 %v253, %v375
        %v377 = vpop.f32.mrb[0].mxu0
        %378 = vmatprep.mubr.f32.mxu0 0.0
        %379 = vmatmul.mubr.f32.gmra.mrb[0].mxu0 %v263
        %v380 = vpop.f32.mrb[0].mxu0
        %v381 = vadd.f32 %v253, %v380
        %v382 = vpop.f32.mrb[0].mxu0
        %383 = vmatprep.mubr.f32.mxu0 0.0
        %384 = vmatmul.mubr.f32.gmra.mrb[0].mxu0 %v266
        %v385 = vpop.f32.mrb[0].mxu0
        %v386 = vadd.f32 %v253, %v385
        %v387 = vpop.f32.mrb[0].mxu0
        %388 = vmatprep.mubr.f32.mxu0 0.0
        %389 = vmatmul.mubr.f32.gmra.mrb[0].mxu0 %v269
        %v390 = vpop.f32.mrb[0].mxu0
        %v391 = vadd.f32 %v253, %v390
        %v392 = vpop.f32.mrb[0].mxu0
        %393 = vmatprep.mubr.f32.mxu0 0.0
        %394 = vmatmul.mubr.f32.gmra.mrb[0].mxu0 %v272
        %v395 = vpop.f32.mrb[0].mxu0
        %v396 = vadd.f32 %v253, %v395
        %v397 = vpop.f32.mrb[0].mxu0
        %398 = vmatprep.mubr.f32.mxu0 0.0
        %399 = vmatmul.mubr.f32.gmra.mrb[0].mxu0 %v275
        %v400 = vpop.f32.mrb[0].mxu0
        %v401 = vadd.f32 %v253, %v400
        %v402 = vpop.f32.mrb[0].mxu0
        %403 = vmatprep.mubr.f32.mxu0 0.0
        %404 = vmatmul.mubr.f32.gmra.mrb[0].mxu0 %v278
        %v405 = vpop.f32.mrb[0].mxu0
        %v406 = vadd.f32 %v253, %v405
        %v407 = vpop.f32.mrb[0].mxu0
        %408 = vmatprep.mubr.f32.mxu0 0.0
        %409 = vmatmul.mubr.f32.gmra.mrb[0].mxu0 %v281
        %v410 = vpop.f32.mrb[0].mxu0
        %v411 = vadd.f32 %v253, %v410
        %v412 = vpop.f32.mrb[0].mxu0
        %413 = vmatprep.mubr.f32.mxu0 0.0
        %414 = vmatmul.mubr.f32.gmra.mrb[0].mxu0 %v284
        %v415 = vpop.f32.mrb[0].mxu0
        %v416 = vadd.f32 %v253, %v415
        %v417 = vpop.f32.mrb[0].mxu0
        %418 = vmatprep.mubr.f32.mxu0 0.0
        %419 = vmatmul.mubr.f32.gmra.mrb[0].mxu0 %v287
        %v420 = vpop.f32.mrb[0].mxu0
        %v421 = vadd.f32 %v253, %v420
        %v422 = vpop.f32.mrb[0].mxu0
        %423 = vmatprep.mubr.f32.mxu0 0.0
        %424 = vmatmul.mubr.f32.gmra.mrb[0].mxu0 %v290
        %v425 = vpop.f32.mrb[0].mxu0
        %v426 = vadd.f32 %v253, %v425
        %v427 = vpop.f32.mrb[0].mxu0
        %428 = vmatprep.mubr.f32.mxu0 0.0
        %429 = vmatmul.mubr.f32.gmra.mrb[0].mxu0 %v293
        %v430 = vpop.f32.mrb[0].mxu0
        %v431 = vadd.f32 %v253, %v430
        %v432 = vpop.f32.mrb[0].mxu0
        %433 = vmatprep.mubr.f32.mxu0 0.0
        %434 = vmatmul.mubr.f32.gmra.mrb[0].mxu0 %v296
        %v435 = vpop.f32.mrb[0].mxu0
        %v436 = vadd.f32 %v253, %v435
        %v437 = vpop.f32.mrb[0].mxu0
        %438 = vmatprep.mubr.f32.mxu0 0.0
        %439 = vmatmul.mubr.f32.gmra.mrb[0].mxu0 %v299
        %v440 = vpop.f32.mrb[0].mxu0
        %v441 = vadd.f32 %v253, %v440
        %v442 = vpop.f32.mrb[0].mxu0
        %443 = vmatprep.mubr.f32.mxu0 0.0
        %444 = vmatmul.mubr.f32.gmra.mrb[0].mxu0 %v302
        %v445 = vpop.f32.mrb[0].mxu0
        %v446 = vadd.f32 %v253, %v445
        %v447 = vpop.f32.mrb[0].mxu0
        %448 = vdwg.mxu0
        %v449 = vtanh.pop %v371
        %v450 = vtanh.pop %v376
        %v451 = vtanh.pop %v381
        %v452 = vtanh.pop %v386
        %v453 = vtanh.pop %v391
        %v454 = vtanh.pop %v396
        %v455 = vtanh.pop %v401
        %v456 = vtanh.pop %v406
        %v457 = vtanh.pop %v411
        %v458 = vtanh.pop %v416
        %v459 = vtanh.pop %v421
        %v460 = vtanh.pop %v426
        %v461 = vtanh.pop %v431
        %v462 = vtanh.pop %v436
        %v463 = vtanh.pop %v441
        %v464 = vtanh.pop %v446
        %v465 = vmul.f32 %v449, 1.442695
        %v466 = vpow.pop %v465
        %v467 = vmul.f32 %v450, 1.442695
        %v468 = vpow.pop %v467
        %v469 = vmul.f32 %v451, 1.442695
        %v470 = vpow.pop %v469
        %v471 = vmul.f32 %v452, 1.442695
        %v472 = vpow.pop %v471
        %v473 = vmul.f32 %v453, 1.442695
        %v474 = vpow.pop %v473
        %v475 = vmul.f32 %v454, 1.442695
        %v476 = vpow.pop %v475
        %v477 = vmul.f32 %v455, 1.442695
        %v478 = vpow.pop %v477
        %v479 = vmul.f32 %v456, 1.442695
        %v480 = vpow.pop %v479
        %v481 = vmul.f32 %v457, 1.442695
        %v482 = vpow.pop %v481
        %v483 = vmul.f32 %v458, 1.442695
        %v484 = vpow.pop %v483
        %v485 = vmul.f32 %v459, 1.442695
        %v486 = vpow.pop %v485
        %v487 = vmul.f32 %v460, 1.442695
        %v488 = vpow.pop %v487
        %v489 = vmul.f32 %v461, 1.442695
        %v490 = vpow.pop %v489
        %v491 = vmul.f32 %v462, 1.442695
        %v492 = vpow.pop %v491
        %v493 = vmul.f32 %v463, 1.442695
        %v494 = vpow.pop %v493
        %v495 = vmul.f32 %v464, 1.442695
        %v496 = vpow.pop %v495
        %v497 = vmul.f32 %v230, %v466
        %v498 = vmul.f32 %v231, %v468
        %v499 = vmul.f32 %v232, %v470
        %v500 = vmul.f32 %v233, %v472
        %v501 = vmul.f32 %v234, %v474
        %v502 = vmul.f32 %v235, %v476
        %v503 = vmul.f32 %v236, %v478
        %v504 = vmul.f32 %v237, %v480
        %v505 = vmul.f32 %v238, %v482
        %v506 = vmul.f32 %v239, %v484
        %v507 = vmul.f32 %v240, %v486
        %v508 = vmul.f32 %v241, %v488
        %v509 = vmul.f32 %v242, %v490
        %v510 = vmul.f32 %v243, %v492
        %v511 = vmul.f32 %v244, %v494
        %v512 = vmul.f32 %v245, %v496
        %529 = vrot.lane.b32.xlu0 %v371, 112
        %v530 = vpop.permute.xlu0 %529
        %531 = vrot.lane.b32.xlu0 %v376, 112
        %v532 = vpop.permute.xlu0 %531
        %533 = vrot.lane.b32.xlu0 %v381, 112
        %v534 = vpop.permute.xlu0 %533
        %535 = vrot.lane.b32.xlu0 %v386, 112
        %v536 = vpop.permute.xlu0 %535
        %537 = vrot.lane.b32.xlu0 %v391, 112
        %v538 = vpop.permute.xlu0 %537
        %539 = vrot.lane.b32.xlu0 %v396, 112
        %v540 = vpop.permute.xlu0 %539
        %541 = vrot.lane.b32.xlu0 %v401, 112
        %v542 = vpop.permute.xlu0 %541
        %543 = vrot.lane.b32.xlu0 %v406, 112
        %v544 = vpop.permute.xlu0 %543
        %545 = vrot.lane.b32.xlu0 %v411, 112
        %v546 = vpop.permute.xlu0 %545
        %547 = vrot.lane.b32.xlu0 %v416, 112
        %v548 = vpop.permute.xlu0 %547
        %549 = vrot.lane.b32.xlu0 %v421, 112
        %v550 = vpop.permute.xlu0 %549
        %551 = vrot.lane.b32.xlu0 %v426, 112
        %v552 = vpop.permute.xlu0 %551
        %553 = vrot.lane.b32.xlu0 %v431, 112
        %v554 = vpop.permute.xlu0 %553
        %555 = vrot.lane.b32.xlu0 %v436, 112
        %v556 = vpop.permute.xlu0 %555
        %557 = vrot.lane.b32.xlu0 %v441, 112
        %v558 = vpop.permute.xlu0 %557
        %559 = vrot.lane.b32.xlu0 %v446, 112
        %v560 = vpop.permute.xlu0 %559
        %v577 = vadd.f32 %v497, %v530
        %v578 = vadd.f32 %v498, %v532
        %v579 = vadd.f32 %v499, %v534
        %v580 = vadd.f32 %v500, %v536
        %v581 = vadd.f32 %v501, %v538
        %v582 = vadd.f32 %v502, %v540
        %v583 = vadd.f32 %v503, %v542
        %v584 = vadd.f32 %v504, %v544
        %v585 = vadd.f32 %v505, %v546
        %v586 = vadd.f32 %v506, %v548
        %v587 = vadd.f32 %v507, %v550
        %v588 = vadd.f32 %v508, %v552
        %v589 = vadd.f32 %v509, %v554
        %v590 = vadd.f32 %v510, %v556
        %v591 = vadd.f32 %v511, %v558
        %v592 = vadd.f32 %v512, %v560
        %v593 = vld [vmem:[#allocation2] sm:$0x1]
        %v594 = vmul.f32 %v214, %v214
        %v595 = vmul.f32 %v215, %v215
        %v596 = vmul.f32 %v216, %v216
        %v597 = vmul.f32 %v217, %v217
        %v598 = vmul.f32 %v218, %v218
        %v599 = vmul.f32 %v219, %v219
        %v600 = vmul.f32 %v220, %v220
        %v601 = vmul.f32 %v221, %v221
        %v602 = vmul.f32 %v222, %v222
        %v603 = vmul.f32 %v223, %v223
        %v604 = vmul.f32 %v224, %v224
        %v605 = vmul.f32 %v225, %v225
        %v606 = vmul.f32 %v226, %v226
        %v607 = vmul.f32 %v227, %v227
        %v608 = vmul.f32 %v228, %v228
        %v609 = vmul.f32 %v229, %v229
        %v610 = vsel %vm255, %v594, 0.0
        %v611 = vsel %vm255, %v595, 0.0
        %v612 = vadd.f32 %v610, %v611
        %v613 = vsel %vm255, %v596, 0.0
        %v614 = vadd.f32 %v612, %v613
        %v615 = vsel %vm255, %v597, 0.0
        %v616 = vadd.f32 %v614, %v615
        %v617 = vsel %vm255, %v598, 0.0
        %v618 = vadd.f32 %v616, %v617
        %v619 = vsel %vm255, %v599, 0.0
        %v620 = vadd.f32 %v618, %v619
        %v621 = vsel %vm255, %v600, 0.0
        %v622 = vadd.f32 %v620, %v621
        %v623 = vsel %vm255, %v601, 0.0
        %v624 = vadd.f32 %v622, %v623
        %v625 = vsel %vm255, %v602, 0.0
        %v626 = vadd.f32 %v624, %v625
        %v627 = vsel %vm255, %v603, 0.0
        %v628 = vadd.f32 %v626, %v627
        %v629 = vsel %vm255, %v604, 0.0
        %v630 = vadd.f32 %v628, %v629
        %v631 = vsel %vm255, %v605, 0.0
        %v632 = vadd.f32 %v630, %v631
        %v633 = vsel %vm255, %v606, 0.0
        %v634 = vadd.f32 %v632, %v633
        %v635 = vsel %vm255, %v607, 0.0
        %v636 = vadd.f32 %v634, %v635
        %v637 = vsel %vm255, %v608, 0.0
        %v638 = vadd.f32 %v636, %v637
        %v639 = vsel %vm255, %v609, 0.0
        %v640 = vadd.f32 %v638, %v639
        %641 = vadd.xlane.f32.xlu0 %v640
        %v642 = vpop.xlane.xlu0 %641
        %v643 = vrot.slane %v642, 4
        %v644 = vadd.f32 %v642, %v643
        %v645 = vrot.slane %v644, 2
        %v646 = vadd.f32 %v644, %v645
        %v647 = vrot.slane %v646, 1
        %v648 = vadd.f32 %v646, %v647
        %s649 = vtos %v648
        %v650 = vstv %s649
        %v651 = vmul.f32 %v577, %v577
        %v652 = vmul.f32 %v578, %v578
        %v653 = vmul.f32 %v579, %v579
        %v654 = vmul.f32 %v580, %v580
        %v655 = vmul.f32 %v581, %v581
        %v656 = vmul.f32 %v582, %v582
        %v657 = vmul.f32 %v583, %v583
        %v658 = vmul.f32 %v584, %v584
        %v659 = vmul.f32 %v585, %v585
        %v660 = vmul.f32 %v586, %v586
        %v661 = vmul.f32 %v587, %v587
        %v662 = vmul.f32 %v588, %v588
        %v663 = vmul.f32 %v589, %v589
        %v664 = vmul.f32 %v590, %v590
        %v665 = vmul.f32 %v591, %v591
        %v666 = vmul.f32 %v592, %v592
        %v667 = vsel %vm255, %v651, 0.0
        %v668 = vsel %vm255, %v652, 0.0
        %v669 = vadd.f32 %v667, %v668
        %v670 = vsel %vm255, %v653, 0.0
        %v671 = vadd.f32 %v669, %v670
        %v672 = vsel %vm255, %v654, 0.0
        %v673 = vadd.f32 %v671, %v672
        %v674 = vsel %vm255, %v655, 0.0
        %v675 = vadd.f32 %v673, %v674
        %v676 = vsel %vm255, %v656, 0.0
        %v677 = vadd.f32 %v675, %v676
        %v678 = vsel %vm255, %v657, 0.0
        %v679 = vadd.f32 %v677, %v678
        %v680 = vsel %vm255, %v658, 0.0
        %v681 = vadd.f32 %v679, %v680
        %v682 = vsel %vm255, %v659, 0.0
        %v683 = vadd.f32 %v681, %v682
        %v684 = vsel %vm255, %v660, 0.0
        %v685 = vadd.f32 %v683, %v684
        %v686 = vsel %vm255, %v661, 0.0
        %v687 = vadd.f32 %v685, %v686
        %v688 = vsel %vm255, %v662, 0.0
        %v689 = vadd.f32 %v687, %v688
        %v690 = vsel %vm255, %v663, 0.0
        %v691 = vadd.f32 %v689, %v690
        %v692 = vsel %vm255, %v664, 0.0
        %v693 = vadd.f32 %v691, %v692
        %v694 = vsel %vm255, %v665, 0.0
        %v695 = vadd.f32 %v693, %v694
        %v696 = vsel %vm255, %v666, 0.0
        %v697 = vadd.f32 %v695, %v696
        %698 = vadd.xlane.f32.xlu0 %v697
        %v699 = vpop.xlane.xlu0 %698
        %v700 = vrot.slane %v699, 4
        %v701 = vadd.f32 %v699, %v700
        %v702 = vrot.slane %v701, 2
        %v703 = vadd.f32 %v701, %v702
        %v704 = vrot.slane %v703, 1
        %v705 = vadd.f32 %v703, %v704
        %s706 = vtos %v705
        %v707 = vstv %s706
        %v708 = vadd.f32 %v650, %v707
        %v709 = vadd.f32 %v593, %v708
        %vm710 = vcmask 0
        %711 = vst.msk [vmem:[#allocation2] sm:$0x1] %vm710, %v709
        %p712 = scmp.eq.s32.totalorder %s16, 3
        // Predicated region
        $region41: #{model_forward.1} parent=35 // pred_check
          %p713 = pneg %p712
        $region42: #{model_forward.1} parent=35 // pred_check_branch
          %715 = sbr.rel (%p713) target = $region44
        $region43: #{model_forward.1} parent=35 // pred_region
          %v716 = vld [vmem:[#allocation2] sm:$0x1]
          %v717 = vmul.f32 %v716, 0.0009765625
          %v718 = vadd.f32 %v717, 29.406033
          %719 = vst.msk [vmem:[#allocation3] sm:$0x1] %vm710, %v718
        $region44: #{model_forward.1} parent=35 // pred_fallthru
          _
        // Predicated region
        $region45: #{model_forward.1} parent=35 // pred_check
          %p720 = pneg %p123
        $region46: #{model_forward.1} parent=35 // pred_check_branch
          %722 = sbr.rel (%p720) target = $region48
        $region47: #{model_forward.1} parent=35 // pred_region
          %s724 = ssub.s32 16, 16
          %725 = vsyncadd [#allocation4], %s724
          %s727 = sshll.u32 [#allocation3], 4
          %s728 = int_to_ptr.vmem [resolvable:$true] %s727
          %730 = dma.vmem_to_hbm [thread:$0]  %s728, 16, %s4, [#allocation4]
        $region48: #{model_forward.1} parent=35 // pred_fallthru
          _
        // Predicated region
        $region49: #{model_forward.1} parent=35 // pred_check
          %p731 = pneg %p123
        $region50: #{model_forward.1} parent=35 // pred_check_branch
          %733 = sbr.rel (%p731) target = $region52
        $region51: #{model_forward.1} parent=35 // pred_region
          %734 = dma.done [#allocation4], 16
        $region52: #{model_forward.1} parent=35 // pred_fallthru
          _
      $region36: #{model_forward.1} parent=5 // pred_fallthru
        _
      %p735 = scmp.le.s32.totalorder 2, %s11
      // Predicated region
      $region53: #{model_forward.1} parent=5 // pred_check
        %p736 = pneg %p735
      $region54: #{model_forward.1} parent=5 // pred_check_branch
        %738 = sbr.rel (%p736) target = $region56
      $region55: #{model_forward.1} parent=5 // pred_region
        %s739 = ssub.s32 %s11, 2
      $region56: #{model_forward.1} parent=5 // pred_fallthru
        _
    $region6: #{model_forward.1} parent=1 // loop_footer
      %s15 = sadd.s32 1, %s11
    $region7: #{model_forward.1} parent=1 // loop_footer_branch
      %10 = sbr.rel target = $region3
    $region8: #{model_forward.1} parent=1 // loop_exit
      _
    %740 = vsyncpa [#allocation4], 1
    %s741 = scalar_lea.sflag [#allocation4], 1
    %742 = vsyncpa %s741, 1

</llo_original>
